<compile_context>
chip_gen: v7x
topology: tpu7x:2x2x1
jax: 0.10.0
libtpu: 0.0.40
codegen_flags: <defaults>
</compile_context>

<pallas_src>
import functools

import jax
import jax.numpy as jnp
import numpy as np
from jax import lax
from jax.experimental import pallas as pl
from jax.experimental.pallas import tpu as pltpu


# ----------------------------------------------------------------------------
# Pallas kernel: post-sort Lovász reduction over "chunk rows".
# grid = (B, J); each step handles R_blk = n_sub * R_sub chunk rows (each of
# width C) of one image. Batch axis "parallel", chunk axis "arbitrary".
# ----------------------------------------------------------------------------
def _lovasz_kernel(gts_ref, err_ref, gt_ref, out_ref,
                   tri_c_ref, tri_r_ref, pos_ref, carry_ref,
                   *, C, R_sub, n_sub):
    b = pl.program_id(0)
    j = pl.program_id(1)

    @pl.when(j == 0)
    def _init():
        # (C, C) inclusive upper-triangular ones: tri_c[k, c] = 1 iff k <= c.
        rk = lax.broadcasted_iota(jnp.int32, (C, C), 0)
        ck = lax.broadcasted_iota(jnp.int32, (C, C), 1)
        tri_c_ref[...] = jnp.where(rk <= ck, 1.0, 0.0).astype(jnp.bfloat16)
        # (R_sub, R_sub) strict lower-triangular ones: tri_r[r, r'] = 1 iff r' < r.
        rr = lax.broadcasted_iota(jnp.int32, (R_sub, R_sub), 0)
        rc = lax.broadcasted_iota(jnp.int32, (R_sub, R_sub), 1)
        tri_r_ref[...] = jnp.where(rc < rr, 1.0, 0.0).astype(jnp.bfloat16)
        # Hoisted 1-based local positions (row-major within a sub-block).
        pr = lax.broadcasted_iota(jnp.int32, (R_sub, C), 0)
        pc = lax.broadcasted_iota(jnp.int32, (R_sub, C), 1)
        pos_ref[...] = (pr * C + pc + 1).astype(jnp.float32)
        carry_ref[...] = jnp.zeros_like(carry_ref)
        out_ref[...] = jnp.zeros_like(out_ref)

    gts = gts_ref[b]                 # scalar f32: total positives of this image
    carry = carry_ref[...]           # (1, 1) positives seen before this block
    tri_c = tri_c_ref[...]
    tri_r = tri_r_ref[...]
    pos_local = pos_ref[...]         # (R_sub, C)

    partial = jnp.float32(0.0)
    for s in range(n_sub):
        r0 = s * R_sub
        gt_b = gt_ref[r0:r0 + R_sub, :]      # (R_sub, C) bf16 in {0, 1}
        err = err_ref[r0:r0 + R_sub, :]      # (R_sub, C) f32 (globally sorted desc)
        gt_f = gt_b.astype(jnp.float32)

        # Within-chunk inclusive cumsum: one big-M MXU matmul (exact for 0/1).
        local_cum = jnp.dot(gt_b, tri_c, preferred_element_type=jnp.float32)
        # Exclusive prefix over the chunk rows of this sub-block (tiny matmul).
        tot = local_cum[:, C - 1:C].astype(jnp.bfloat16)   # row sums <= C (exact)
        ex = jnp.dot(tri_r, tot, preferred_element_type=jnp.float32)  # (R_sub, 1)
        cum = local_cum + (ex + carry)       # global inclusive cumsum of positives

        base = ((j * n_sub + s) * (R_sub * C)).astype(jnp.float32)
        pos = pos_local + base               # 1-based global position in the image

        inter = gts - cum                    # intersection
        union = inter + pos                  # = gts + cumsum(1 - gt) >= 1
        t_cur = inter * pl.reciprocal(union, approx=False)      # = 1 - jaccard
        # Previous element's (1 - jaccard), recomputed elementwise: prev_cum =
        # cum - gt, prev_pos = pos - 1 (valid across chunk/step boundaries too).
        p_inter = inter + gt_f
        p_union = union + (gt_f - 1.0)
        t_prev = p_inter * pl.reciprocal(p_union, approx=False)
        # p_union == 0 only at the very first element when gts == 0 (grad = jac).
        grad = jnp.where(p_union > 0.0, t_prev, 1.0) - t_cur     # jac - jac_prev

        partial = partial + jnp.sum(jnp.maximum(err, 0.0) * grad)
        carry = carry + jnp.sum(gt_f, axis=(0, 1), keepdims=True)

    out_ref[...] += partial
    carry_ref[...] = carry


# ----------------------------------------------------------------------------
# Wrapper
# ----------------------------------------------------------------------------
def lovasz_hinge_loss(logits, labels, *, chunk=256, max_rows=256, max_sub=4):
    """logits, labels: (B, 1, H, W) float arrays. Returns scalar f32 loss.

    chunk    : cumsum chunk width (MXU-native: 256 on v6e/v7x, 128 on v5e).
    max_rows : chunk rows per matmul (M dimension), multiple of 16, <= 512.
    max_sub  : sub-blocks per grid step (DMA tile = max_sub*max_rows x chunk).
    """
    assert chunk % 128 == 0 and chunk >= 128
    assert max_rows % 16 == 0 and 16 <= max_rows <= 512
    assert max_sub >= 1

    B = logits.shape[0]
    lg = logits.reshape(B, -1).astype(jnp.float32)   # squeeze(1) + flatten
    lb = labels.reshape(B, -1).astype(jnp.float32)
    N = lg.shape[1]

    C = chunk
    K0 = pl.cdiv(N, C)                                   # chunks required
    R_sub = max(16, min(max_rows, pl.next_power_of_2(K0)))
    n_sub = max(1, min(max_sub, pl.cdiv(K0, R_sub)))
    R_blk = R_sub * n_sub                                # chunk rows per grid step
    K_total = pl.cdiv(K0, R_blk) * R_blk                 # padded chunk count / image
    Np = K_total * C
    J = K_total // R_blk                                 # grid steps per image
    if Np + 1 >= (1 << 24):
        raise ValueError("image too large for exact f32 position/cumsum arithmetic")

    # hinge errors in plain JAX (fused by XLA with the sort-key prep)
    signs = 2.0 * lb - 1.0
    errors = 1.0 - lg * signs

    # TODO(synk): torch.sort has no Pallas TPU equivalent; a single multi-operand
    # descending co-sort (on the UN-padded arrays) replaces argsort + gathers.
    neg_sorted, gt_sorted = jax.lax.sort((-errors, lb), num_keys=1)
    errors_sorted = -neg_sorted
    gts = jnp.sum(lb, axis=1)                            # (B,) total positives

    # Pad columns AFTER the sort: err -> very negative (relu -> 0), gt -> 0,
    # so padded positions contribute exactly zero loss.
    pad = Np - N
    if pad:
        errors_sorted = jnp.pad(errors_sorted, ((0, 0), (0, pad)),
                                constant_values=-1e30)
        gt_sorted = jnp.pad(gt_sorted, ((0, 0), (0, pad)), constant_values=0.0)

    # Free row-major reshape to chunk rows; gt narrowed to bf16 (lossless 0/1).
    err_rows = errors_sorted.reshape(B * K_total, C)
    gt_rows = gt_sorted.astype(jnp.bfloat16).reshape(B * K_total, C)

    kernel = functools.partial(_lovasz_kernel, C=C, R_sub=R_sub, n_sub=n_sub)
    per_image = pl.pallas_call(
        kernel,
        out_shape=jax.ShapeDtypeStruct((B, 1, 128), jnp.float32),
        grid_spec=pltpu.PrefetchScalarGridSpec(
            num_scalar_prefetch=1,                       # gts -> SMEM
            grid=(B, J),
            in_specs=[
                pl.BlockSpec((R_blk, C), lambda b, j, gts: (b * J + j, 0)),  # errors
                pl.BlockSpec((R_blk, C), lambda b, j, gts: (b * J + j, 0)),  # labels
            ],
            out_specs=pl.BlockSpec((1, 1, 128), lambda b, j, gts: (b, 0, 0)),
            scratch_shapes=[
                pltpu.VMEM((C, C), jnp.bfloat16),          # within-chunk cumsum tri
                pltpu.VMEM((R_sub, R_sub), jnp.bfloat16),  # cross-chunk prefix tri
                pltpu.VMEM((R_sub, C), jnp.float32),       # hoisted local positions
                pltpu.VMEM((1, 1), jnp.float32),           # running positive count
            ],
        ),
        compiler_params=pltpu.CompilerParams(
            dimension_semantics=("parallel", "arbitrary")),
    )(gts, err_rows, gt_rows)

    return jnp.sum(per_image[:, 0, 0]) / B


# ----------------------------------------------------------------------------
# Pure-JAX reference (mirrors the PyTorch lovasz_hinge per_image=True)
# ----------------------------------------------------------------------------
def lovasz_hinge_loss_ref(logits, labels):
    B = logits.shape[0]
    lg = logits.reshape(B, -1).astype(jnp.float32)
    lb = labels.reshape(B, -1).astype(jnp.float32)
    signs = 2.0 * lb - 1.0
    errors = 1.0 - lg * signs
    perm = jnp.argsort(-errors, axis=1)
    errors_sorted = jnp.take_along_axis(errors, perm, axis=1)
    gt_sorted = jnp.take_along_axis(lb, perm, axis=1)

    gts = jnp.sum(gt_sorted, axis=1, keepdims=True)
    intersection = gts - jnp.cumsum(gt_sorted, axis=1)
    union = gts + jnp.cumsum(1.0 - gt_sorted, axis=1)
    jaccard = 1.0 - intersection / union
    grad = jnp.concatenate([jaccard[:, :1], jaccard[:, 1:] - jaccard[:, :-1]], axis=1)
    per_image = jnp.sum(jnp.maximum(errors_sorted, 0.0) * grad, axis=1)
    return jnp.mean(per_image)


if __name__ == "__main__":
    key = jax.random.PRNGKey(0)
    k1, k2 = jax.random.split(key)
    B, Cc, H, W = 2, 1, 16, 16
    logits = jax.random.normal(k1, (B, Cc, H, W), dtype=jnp.float32)
    labels = (jax.random.uniform(k2, (B, Cc, H, W)) > 0.5).astype(jnp.float32)

    loss_fn = jax.jit(lovasz_hinge_loss)

    loss = loss_fn(logits, labels)
    jax.block_until_ready(loss)
    ref = lovasz_hinge_loss_ref(logits, labels)
    assert np.allclose(np.asarray(loss), np.asarray(ref), rtol=1e-4, atol=1e-4), (
        float(loss), float(ref))

    # edge case: one image with no positives (gts == 0)
    labels0 = labels.at[0].set(0.0)
    loss0 = loss_fn(logits, labels0)
    jax.block_until_ready(loss0)
    ref0 = lovasz_hinge_loss_ref(logits, labels0)
    assert np.allclose(np.asarray(loss0), np.asarray(ref0), rtol=1e-4, atol=1e-4), (
        float(loss0), float(ref0))

    # larger case with small tile params to exercise multi-sub-block and
    # multi-grid-step carry paths (J > 1, n_sub > 1)
    k3, k4 = jax.random.split(k2)
    H2 = W2 = 96
    logits2 = jax.random.normal(k3, (B, Cc, H2, W2), dtype=jnp.float32)
    labels2 = (jax.random.uniform(k4, (B, Cc, H2, W2)) > 0.5).astype(jnp.float32)
    loss_fn2 = jax.jit(functools.partial(lovasz_hinge_loss,
                                         chunk=128, max_rows=16, max_sub=2))
    loss2 = loss_fn2(logits2, labels2)
    jax.block_until_ready(loss2)
    ref2 = lovasz_hinge_loss_ref(logits2, labels2)
    assert np.allclose(np.asarray(loss2), np.asarray(ref2), rtol=1e-4, atol=1e-4), (
        float(loss2), float(ref2))

    print("KERNEL_OK")
</pallas_src>

<mosaic_0001>
module attributes {stable_mosaic.version = 11 : i64} {
  func.func @_lovasz_kernel(%arg0: i32, %arg1: i32, %arg2: memref<2xf32, #tpu.memory_space<smem>>, %arg3: memref<16x256xf32, #tpu.memory_space<vmem>>, %arg4: memref<16x256xbf16, #tpu.memory_space<vmem>>, %arg5: memref<1x1x128xf32, #tpu.memory_space<vmem>>, %arg6: memref<256x256xbf16, #tpu.memory_space<vmem>>, %arg7: memref<16x16xbf16, #tpu.memory_space<vmem>>, %arg8: memref<16x256xf32, #tpu.memory_space<vmem>>, %arg9: memref<1x1xf32, #tpu.memory_space<vmem>>) attributes {dimension_semantics = [#tpu.dimension_semantics<parallel>, #tpu.dimension_semantics<arbitrary>], iteration_bounds = array<i64: 2, 1>, scalar_prefetch = 1 : i64, scratch_operands = 4 : i64, tpu.core_type = #tpu.core_type<tc>, window_params = [{transform_indices = @transform_0, window_bounds = array<i64: 16, 256>}, {transform_indices = @transform_1, window_bounds = array<i64: 16, 256>}, {transform_indices = @transform_2, window_bounds = array<i64: 1, 1, 128>}]} {
    %c0_i32 = arith.constant 0 : i32
    %0 = arith.cmpi eq, %arg1, %c0_i32 : i32
    %1 = arith.extui %0 : i1 to i32
    %c0_i32_0 = arith.constant 0 : i32
    %2 = arith.cmpi ne, %1, %c0_i32_0 : i32
    scf.if %2 {
      %61 = tpu.iota {dimensions = array<i32: 0>} : vector<256x256xi32>
      %62 = tpu.iota {dimensions = array<i32: 1>} : vector<256x256xi32>
      %63 = arith.cmpi sle, %61, %62 : vector<256x256xi32>
      %cst_29 = arith.constant 1.000000e+00 : f32
      %cst_30 = arith.constant 0.000000e+00 : f32
      %64 = vector.broadcast %cst_29 : f32 to vector<256x256xf32>
      %65 = vector.broadcast %cst_30 : f32 to vector<256x256xf32>
      %66 = arith.select %63, %64, %65 : vector<256x256xi1>, vector<256x256xf32>
      %67 = arith.truncf %66 : vector<256x256xf32> to vector<256x256xbf16>
      %c0_31 = arith.constant 0 : index
      %c0_32 = arith.constant 0 : index
      %68 = vector.load %arg6[%c0_31, %c0_32] : memref<256x256xbf16, #tpu.memory_space<vmem>>, vector<256x256xbf16>
      tpu.vector_store %arg6[%c0_31, %c0_32], %67 {strides = array<i32>} : memref<256x256xbf16, #tpu.memory_space<vmem>>, vector<256x256xbf16>,
      %69 = tpu.iota {dimensions = array<i32: 0>} : vector<16x16xi32>
      %70 = tpu.iota {dimensions = array<i32: 1>} : vector<16x16xi32>
      %71 = arith.cmpi slt, %70, %69 : vector<16x16xi32>
      %cst_33 = arith.constant 1.000000e+00 : f32
      %cst_34 = arith.constant 0.000000e+00 : f32
      %72 = vector.broadcast %cst_33 : f32 to vector<16x16xf32>
      %73 = vector.broadcast %cst_34 : f32 to vector<16x16xf32>
      %74 = arith.select %71, %72, %73 : vector<16x16xi1>, vector<16x16xf32>
      %75 = arith.truncf %74 : vector<16x16xf32> to vector<16x16xbf16>
      %c0_35 = arith.constant 0 : index
      %c0_36 = arith.constant 0 : index
      %76 = vector.load %arg7[%c0_35, %c0_36] : memref<16x16xbf16, #tpu.memory_space<vmem>>, vector<16x16xbf16>
      tpu.vector_store %arg7[%c0_35, %c0_36], %75 {strides = array<i32>} : memref<16x16xbf16, #tpu.memory_space<vmem>>, vector<16x16xbf16>,
      %77 = tpu.iota {dimensions = array<i32: 0>} : vector<16x256xi32>
      %78 = tpu.iota {dimensions = array<i32: 1>} : vector<16x256xi32>
      %c256_i32 = arith.constant 256 : i32
      %79 = vector.broadcast %c256_i32 : i32 to vector<16x256xi32>
      %80 = arith.muli %77, %79 : vector<16x256xi32>
      %81 = arith.addi %80, %78 : vector<16x256xi32>
      %c1_i32_37 = arith.constant 1 : i32
      %82 = vector.broadcast %c1_i32_37 : i32 to vector<16x256xi32>
      %83 = arith.addi %81, %82 : vector<16x256xi32>
      %84 = arith.sitofp %83 : vector<16x256xi32> to vector<16x256xf32>
      %c0_38 = arith.constant 0 : index
      %c0_39 = arith.constant 0 : index
      %85 = vector.load %arg8[%c0_38, %c0_39] : memref<16x256xf32, #tpu.memory_space<vmem>>, vector<16x256xf32>
      tpu.vector_store %arg8[%c0_38, %c0_39], %84 {strides = array<i32>} : memref<16x256xf32, #tpu.memory_space<vmem>>, vector<16x256xf32>,
      %cst_40 = arith.constant 0.000000e+00 : f32
      %86 = vector.broadcast %cst_40 : f32 to vector<1x1xf32>
      %c0_41 = arith.constant 0 : index
      %c0_42 = arith.constant 0 : index
      %87 = vector.load %arg9[%c0_41, %c0_42] : memref<1x1xf32, #tpu.memory_space<vmem>>, vector<1x1xf32>
      tpu.vector_store %arg9[%c0_41, %c0_42], %86 {strides = array<i32>} : memref<1x1xf32, #tpu.memory_space<vmem>>, vector<1x1xf32>,
      %cst_43 = arith.constant 0.000000e+00 : f32
      %88 = vector.broadcast %cst_43 : f32 to vector<1x1x128xf32>
      %c0_44 = arith.constant 0 : index
      %c0_45 = arith.constant 0 : index
      %c0_46 = arith.constant 0 : index
      %89 = vector.load %arg5[%c0_44, %c0_45, %c0_46] : memref<1x1x128xf32, #tpu.memory_space<vmem>>, vector<1x1x128xf32>
      tpu.vector_store %arg5[%c0_44, %c0_45, %c0_46], %88 {strides = array<i32>} : memref<1x1x128xf32, #tpu.memory_space<vmem>>, vector<1x1x128xf32>,
    } else {
    }
    %3 = arith.index_cast %arg0 : i32 to index
    %4 = memref.load %arg2[%3] : memref<2xf32, #tpu.memory_space<smem>>
    %c0 = arith.constant 0 : index
    %c0_1 = arith.constant 0 : index
    %5 = vector.load %arg9[%c0, %c0_1] : memref<1x1xf32, #tpu.memory_space<vmem>>, vector<1x1xf32>
    %c0_2 = arith.constant 0 : index
    %c0_3 = arith.constant 0 : index
    %6 = vector.load %arg6[%c0_2, %c0_3] : memref<256x256xbf16, #tpu.memory_space<vmem>>, vector<256x256xbf16>
    %c0_4 = arith.constant 0 : index
    %c0_5 = arith.constant 0 : index
    %7 = vector.load %arg7[%c0_4, %c0_5] : memref<16x16xbf16, #tpu.memory_space<vmem>>, vector<16x16xbf16>
    %c0_6 = arith.constant 0 : index
    %c0_7 = arith.constant 0 : index
    %8 = vector.load %arg8[%c0_6, %c0_7] : memref<16x256xf32, #tpu.memory_space<vmem>>, vector<16x256xf32>
    %c0_8 = arith.constant 0 : index
    %c0_9 = arith.constant 0 : index
    %9 = vector.load %arg4[%c0_8, %c0_9] : memref<16x256xbf16, #tpu.memory_space<vmem>>, vector<16x256xbf16>
    %c0_10 = arith.constant 0 : index
    %c0_11 = arith.constant 0 : index
    %10 = vector.load %arg3[%c0_10, %c0_11] : memref<16x256xf32, #tpu.memory_space<vmem>>, vector<16x256xf32>
    %11 = arith.extf %9 : vector<16x256xbf16> to vector<16x256xf32>
    %cst = arith.constant dense<0.000000e+00> : vector<16x256xf32>
    %12 = tpu.matmul %9, %6, %cst {dimension_numbers = #tpu.dot_dimension_numbers<[1], [0], [0], [1], [0, 0, 1, 1], [], []>} : vector<16x256xbf16>, vector<256x256xbf16>, vector<16x256xf32> -> vector<16x256xf32>
    %13 = vector.extract_strided_slice %12 {offsets = [0, 255], sizes = [16, 1], strides = [1, 1]} : vector<16x256xf32> to vector<16x1xf32>
    %14 = arith.truncf %13 : vector<16x1xf32> to vector<16x1xbf16>
    %cst_12 = arith.constant dense<0.000000e+00> : vector<16x1xf32>
    %15 = tpu.matmul %7, %14, %cst_12 {dimension_numbers = #tpu.dot_dimension_numbers<[1], [0], [0], [1], [0, 0, 1, 1], [], []>} : vector<16x16xbf16>, vector<16x1xbf16>, vector<16x1xf32> -> vector<16x1xf32>
    %16 = vector.broadcast %5 : vector<1x1xf32> to vector<16x1xf32>
    %17 = arith.addf %15, %16 : vector<16x1xf32>
    %18 = vector.broadcast %17 : vector<16x1xf32> to vector<16x256xf32>
    %19 = arith.addf %12, %18 : vector<16x256xf32>
    %c1_i32 = arith.constant 1 : i32
    %20 = arith.muli %arg1, %c1_i32 : i32
    %c0_i32_13 = arith.constant 0 : i32
    %21 = arith.addi %20, %c0_i32_13 : i32
    %c4096_i32 = arith.constant 4096 : i32
    %22 = arith.muli %21, %c4096_i32 : i32
    %23 = arith.sitofp %22 : i32 to f32
    %24 = vector.broadcast %23 : f32 to vector<16x256xf32>
    %25 = arith.addf %8, %24 : vector<16x256xf32>
    %26 = vector.broadcast %4 : f32 to vector<16x256xf32>
    %27 = arith.subf %26, %19 : vector<16x256xf32>
    %28 = arith.addf %27, %25 : vector<16x256xf32>
    %29 = tpu.reciprocal %28 : vector<16x256xf32> -> vector<16x256xf32>
    %30 = arith.mulf %27, %29 : vector<16x256xf32>
    %31 = arith.addf %27, %11 : vector<16x256xf32>
    %cst_14 = arith.constant 1.000000e+00 : f32
    %32 = vector.broadcast %cst_14 : f32 to vector<16x256xf32>
    %33 = arith.subf %11, %32 : vector<16x256xf32>
    %34 = arith.addf %28, %33 : vector<16x256xf32>
    %35 = tpu.reciprocal %34 : vector<16x256xf32> -> vector<16x256xf32>
    %36 = arith.mulf %31, %35 : vector<16x256xf32>
    %cst_15 = arith.constant 0.000000e+00 : f32
    %37 = vector.broadcast %cst_15 : f32 to vector<16x256xf32>
    %38 = arith.cmpf ogt, %34, %37 : vector<16x256xf32>
    %cst_16 = arith.constant 1.000000e+00 : f32
    %39 = vector.broadcast %cst_16 : f32 to vector<16x256xf32>
    %40 = arith.select %38, %36, %39 : vector<16x256xi1>, vector<16x256xf32>
    %41 = arith.subf %40, %30 : vector<16x256xf32>
    %cst_17 = arith.constant 0.000000e+00 : f32
    %42 = vector.broadcast %cst_17 : f32 to vector<16x256xf32>
    %43 = arith.maximumf %10, %42 : vector<16x256xf32>
    %44 = arith.mulf %43, %41 : vector<16x256xf32>
    %45 = vector.shape_cast %44 : vector<16x256xf32> to vector<1x16x256xf32>
    %cst_18 = arith.constant dense<0.000000e+00> : vector<1xf32>
    %46 = vector.multi_reduction <add>, %45, %cst_18 [1, 2] : vector<1x16x256xf32> to vector<1xf32>
    %47 = vector.shape_cast %46 : vector<1xf32> to vector<1x1x1xf32>
    %48 = vector.extract %47[0, 0, 0] : f32 from vector<1x1x1xf32>
    %cst_19 = arith.constant 0.000000e+00 : f32
    %49 = arith.addf %cst_19, %48 : f32
    %50 = vector.shape_cast %11 : vector<16x256xf32> to vector<1x16x256xf32>
    %cst_20 = arith.constant dense<0.000000e+00> : vector<1xf32>
    %51 = vector.multi_reduction <add>, %50, %cst_20 [1, 2] : vector<1x16x256xf32> to vector<1xf32>
    %52 = vector.shape_cast %51 : vector<1xf32> to vector<1x1x1xf32>
    %53 = vector.extract %52[0, 0, 0] : f32 from vector<1x1x1xf32>
    %54 = vector.broadcast %53 : f32 to vector<1x1xf32>
    %55 = arith.addf %5, %54 : vector<1x1xf32>
    %c0_21 = arith.constant 0 : index
    %c0_22 = arith.constant 0 : index
    %c0_23 = arith.constant 0 : index
    %56 = vector.load %arg5[%c0_21, %c0_22, %c0_23] : memref<1x1x128xf32, #tpu.memory_space<vmem>>, vector<1x1x128xf32>
    %57 = vector.broadcast %49 : f32 to vector<1x1x128xf32>
    %58 = arith.addf %56, %57 : vector<1x1x128xf32>
    %c0_24 = arith.constant 0 : index
    %c0_25 = arith.constant 0 : index
    %c0_26 = arith.constant 0 : index
    %59 = vector.load %arg5[%c0_24, %c0_25, %c0_26] : memref<1x1x128xf32, #tpu.memory_space<vmem>>, vector<1x1x128xf32>
    tpu.vector_store %arg5[%c0_24, %c0_25, %c0_26], %58 {strides = array<i32>} : memref<1x1x128xf32, #tpu.memory_space<vmem>>, vector<1x1x128xf32>,
    %c0_27 = arith.constant 0 : index
    %c0_28 = arith.constant 0 : index
    %60 = vector.load %arg9[%c0_27, %c0_28] : memref<1x1xf32, #tpu.memory_space<vmem>>, vector<1x1xf32>
    tpu.vector_store %arg9[%c0_27, %c0_28], %55 {strides = array<i32>} : memref<1x1xf32, #tpu.memory_space<vmem>>, vector<1x1xf32>,
    return
  }
  func.func @transform_0(%arg0: i32, %arg1: i32, %arg2: memref<2xf32, #tpu.memory_space<smem>>) -> (i32, i32) {
    %c1_i32 = arith.constant 1 : i32
    %0 = arith.muli %arg0, %c1_i32 : i32
    %1 = arith.addi %0, %arg1 : i32
    %c0_i32 = arith.constant 0 : i32
    %c0_i32_0 = arith.constant 0 : i32
    return %1, %c0_i32 : i32, i32
  }
  func.func @transform_1(%arg0: i32, %arg1: i32, %arg2: memref<2xf32, #tpu.memory_space<smem>>) -> (i32, i32) {
    %c1_i32 = arith.constant 1 : i32
    %0 = arith.muli %arg0, %c1_i32 : i32
    %1 = arith.addi %0, %arg1 : i32
    %c0_i32 = arith.constant 0 : i32
    %c0_i32_0 = arith.constant 0 : i32
    return %1, %c0_i32 : i32, i32
  }
  func.func @transform_2(%arg0: i32, %arg1: i32, %arg2: memref<2xf32, #tpu.memory_space<smem>>) -> (i32, i32, i32) {
    %c0_i32 = arith.constant 0 : i32
    %c0_i32_0 = arith.constant 0 : i32
    %c0_i32_1 = arith.constant 0 : i32
    return %arg0, %c0_i32, %c0_i32_0 : i32, i32, i32
  }
}

</mosaic_0001>

<llo_original>
// kernel: neg.3
$region0: #{neg.3}
  #allocation0 [shape = 's32[1]{0}', space=sflag, size = 0x4, scoped, tag = 'scoped memory for neg.3']
  %s0 = inlined_call_operand.vmem [shape: f32[2,256], index: 0, kind: input, shape index: {}]
  %s1 = inlined_call_operand.vmem [shape: f32[2,256], index: 1, kind: output, shape index: {}]
  %v2 = vld [vmem:[%s0] sm:$0x3]
  %3 = xla_tuple %v2
  %4 = xla_tuple %3
  %v5 = vxor.u32 %v2, 2147483648
  %6 = xla_tuple %v5
  %7 = vst [vmem:[%s1] sm:$0x3] %v5
  %s8 = scalar_lea.vmem %s0, 2
  %v9 = vld [vmem:[%s8] sm:$0x3]
  %10 = xla_tuple %v9
  %11 = xla_tuple %10
  %v12 = vxor.u32 %v9, 2147483648
  %13 = xla_tuple %v12
  %s14 = scalar_lea.vmem %s1, 2
  %15 = vst [vmem:[%s14] sm:$0x3] %v12

// kernel: lovasz_hinge_loss.1
$region0: #{lovasz_hinge_loss.1}
  #allocation0 [shape = 'u32[]', space=smem, size = 0x4, offset = 0x4, fixed_abs, tag = 'smem constant byte address 0x4 - core index']
  #allocation1 [shape = 'u32[144,128]{1,0:T(1,128)}', space=vmem, size = 0x12000, scoped, tag = 'internal scratch']
  #allocation2 [shape = 'bf16[256,256]{1,0:T(16,128)(2,1)}', space=vmem, size = 0x20000, scoped, tag = 'scratch operand']
  #allocation3 [shape = 'bf16[16,16]{1,0:T(16,128)(2,1)}', space=vmem, size = 0x1000, scoped, tag = 'scratch operand']
  #allocation4 [shape = 'f32[16,256]{1,0:T(8,128)}', space=vmem, size = 0x4000, scoped, tag = 'scratch operand']
  #allocation5 [shape = 'f32[1,1]{1,0:T(1,128)}', space=vmem, size = 0x200, scoped, tag = 'scratch operand']
  #allocation6 [shape = 's32[1]{0}', space=sflag, size = 0x4, scoped, tag = 'scoped memory for lovasz_hinge_loss.1']
  #allocation7 [shape = 'u8[512]{0}', space=smem, size = 0x200, scoped, tag = 'prefetched SMEM operand 0']
  %s0 = inlined_call_operand.vmem [shape: f32[2], index: 0, kind: input, shape index: {}]
  %s1 = inlined_call_operand.vmem [shape: f32[32,256], index: 1, kind: input, shape index: {}]
  %s2 = inlined_call_operand.vmem [shape: bf16[32,256], index: 2, kind: input, shape index: {}]
  %s3 = inlined_call_operand.vmem [shape: f32[2,1,128], index: 3, kind: output, shape index: {}]
  %s4 = sld [smem:[#allocation0]]
  $region45: #{lovasz_hinge_loss.1} parent=0
    _
  %s6 = ssub.s32 1, %s4
  %s7 = scalar_select 0, %s6, %s4
  %s8 = sshll.u32 %s0, 4
  %s9 = int_to_ptr.vmem [resolvable:$true] %s8
  %11 = dma.vmem_to_smem %s9, 16, [#allocation7], [#allocation6]
  %12 = dma.done [#allocation6], 16
  %13 = sfence
  loop: start=0, step=1, limit=4
  $region2: #{lovasz_hinge_loss.1} parent=0 // loop_pre_header
    _
  $region3: #{lovasz_hinge_loss.1} parent=0 // loop_header
    %s15 = sphi 0, %s19
    %p16 = scmp.ge.s32.totalorder %s15, 4
    %s22 = sphi 0, %s34
    %s23 = sphi 0, %s30
    %s24 = sphi 0, %s22
    %s25 = sphi 0, %s23
    %s26 = sphi 0, %s24
    %s27 = sphi 0, %s25
    %s39 = sphi 0, %s41
    %s42 = sphi 0, %s39
    %s43 = sphi 0, %s42
    %s59 = sphi 0, %s43
    %s67 = sphi 0, %s69
    %s70 = sphi 0, %s67
    %s71 = sphi 0, %s70
    %s87 = sphi 0, %s71
    %s93 = sphi 0, %s95
    %s96 = sphi 0, %s93
    %s97 = sphi 0, %s96
    %s113 = sphi 0, %s97
  $region4: #{lovasz_hinge_loss.1} parent=0 // loop_header_branch
    %18 = sbr.rel (%p16) target = $region8
  $region5: #{lovasz_hinge_loss.1} parent=0 // loop_body
    %s20 = ssub.s32 %s15, 1
    %s21 = ssub.s32 %s15, 2
    %s28 = sadd.s32 1, %s23
    %p29 = scmp.ge.s32.totalorder %s28, 1
    %s30 = scalar_select %p29, 0, %s28
    %s31 = sadd.s32 1, %s22
    %s32 = scalar_select %p29, %s31, %s22
    %p33 = scmp.ge.s32.totalorder %s32, 2
    %s34 = scalar_select %p33, 0, %s32
    %s35 = sadd.s32 %s22, %s23
    %s36 = sadd.s32 %s34, %s30
    %s37 = ssub.s32 %s35, %s36
    %p38 = scmp.eq.s32.totalorder %s37, 0
    %s40 = sadd.s32 %s39, 1
    %s41 = scalar_select %p38, %s39, %s40
    %p44 = pneg %p38
    %p45 = scmp.eq.s32.totalorder %s15, 1
    %p46 = por %p44, %p45
    %p47 = scmp.ne.s32.totalorder %s39, %s42
    %p48 = scmp.eq.s32.totalorder %s15, 0
    %p49 = por %p47, %p48
    %p50 = scmp.ne.s32.totalorder %s39, %s42
    %p51 = scmp.eq.s32.totalorder %s20, 1
    %p52 = por %p50, %p51
    %p53 = scmp.ne.s32.totalorder %s42, %s43
    %p54 = scmp.eq.s32.totalorder %s20, 0
    %p55 = por %p53, %p54
    %p56 = scmp.ne.s32.totalorder %s42, %s43
    %p57 = scmp.eq.s32.totalorder %s21, 1
    %p58 = por %p56, %p57
    %p60 = scmp.ne.s32.totalorder %s43, %s59
    %p61 = scmp.eq.s32.totalorder %s21, 0
    %p62 = por %p60, %p61
    %s63 = sadd.s32 %s22, %s23
    %s64 = sadd.s32 %s34, %s30
    %s65 = ssub.s32 %s63, %s64
    %p66 = scmp.eq.s32.totalorder %s65, 0
    %s68 = sadd.s32 %s67, 1
    %s69 = scalar_select %p66, %s67, %s68
    %p72 = pneg %p66
    %p73 = scmp.eq.s32.totalorder %s15, 1
    %p74 = por %p72, %p73
    %p75 = scmp.ne.s32.totalorder %s67, %s70
    %p76 = scmp.eq.s32.totalorder %s15, 0
    %p77 = por %p75, %p76
    %p78 = scmp.ne.s32.totalorder %s67, %s70
    %p79 = scmp.eq.s32.totalorder %s20, 1
    %p80 = por %p78, %p79
    %p81 = scmp.ne.s32.totalorder %s70, %s71
    %p82 = scmp.eq.s32.totalorder %s20, 0
    %p83 = por %p81, %p82
    %p84 = scmp.ne.s32.totalorder %s70, %s71
    %p85 = scmp.eq.s32.totalorder %s21, 1
    %p86 = por %p84, %p85
    %p88 = scmp.ne.s32.totalorder %s71, %s87
    %p89 = scmp.eq.s32.totalorder %s21, 0
    %p90 = por %p88, %p89
    %s91 = ssub.s32 %s22, %s34
    %p92 = scmp.eq.s32.totalorder %s91, 0
    %s94 = sadd.s32 %s93, 1
    %s95 = scalar_select %p92, %s93, %s94
    %p98 = pneg %p92
    %p99 = scmp.eq.s32.totalorder %s15, 1
    %p100 = por %p98, %p99
    %p101 = scmp.ne.s32.totalorder %s93, %s96
    %p102 = scmp.eq.s32.totalorder %s15, 0
    %p103 = por %p101, %p102
    %p104 = scmp.ne.s32.totalorder %s93, %s96
    %p105 = scmp.eq.s32.totalorder %s20, 1
    %p106 = por %p104, %p105
    %p107 = scmp.ne.s32.totalorder %s96, %s97
    %p108 = scmp.eq.s32.totalorder %s20, 0
    %p109 = por %p107, %p108
    %p110 = scmp.ne.s32.totalorder %s96, %s97
    %p111 = scmp.eq.s32.totalorder %s21, 1
    %p112 = por %p110, %p111
    %p114 = scmp.ne.s32.totalorder %s97, %s113
    %p115 = scmp.eq.s32.totalorder %s21, 0
    %p116 = por %p114, %p115
    %p117 = scmp.le.s32.totalorder 1, %s15
    %p118 = scmp.lt.s32.totalorder %s15, 3
    %p119 = pnand %p117, %p118
    %p120 = pneg %p119
    // Predicated region
    $region9: #{lovasz_hinge_loss.1} parent=5 // pred_check
      _
    $region10: #{lovasz_hinge_loss.1} parent=5 // pred_check_branch
      %122 = sbr.rel (%p119) target = $region12
    $region11: #{lovasz_hinge_loss.1} parent=5 // pred_region
      %s123 = ssub.s32 %s15, 1
    $region12: #{lovasz_hinge_loss.1} parent=5 // pred_fallthru
      _
    %p124 = scmp.lt.s32.totalorder %s15, 2
    // Predicated region
    $region13: #{lovasz_hinge_loss.1} parent=5 // pred_check
      %p125 = pneg %p124
    $region14: #{lovasz_hinge_loss.1} parent=5 // pred_check_branch
      %127 = sbr.rel (%p125) target = $region16
    $region15: #{lovasz_hinge_loss.1} parent=5 // pred_region
      // Predicated region
      $region17: #{lovasz_hinge_loss.1} parent=15 // pred_check
        %p128 = pneg %p49
      $region18: #{lovasz_hinge_loss.1} parent=15 // pred_check_branch
        %130 = sbr.rel (%p128) target = $region20
      $region19: #{lovasz_hinge_loss.1} parent=15 // pred_region
        %s131 = sadd.s32 %s22, %s23
        %s132 = smul.u32 2, %s131
        %p133 = scmp.lt.s32.totalorder %s132, 3
        %s134 = scalar_select %p133, %s132, 3
        %s135 = smul.addr %s134, 2
        %s136 = smul.addr %s135, 8
        %s137 = scalar_lea.vmem %s1, %s136
        %s138 = sadd.s32 %s22, %s23
        %s139 = smul.u32 2, %s138
      $region20: #{lovasz_hinge_loss.1} parent=15 // pred_fallthru
        _
      // Predicated region
      $region21: #{lovasz_hinge_loss.1} parent=15 // pred_check
        %p140 = pneg %p77
      $region22: #{lovasz_hinge_loss.1} parent=15 // pred_check_branch
        %142 = sbr.rel (%p140) target = $region24
      $region23: #{lovasz_hinge_loss.1} parent=15 // pred_region
        %s143 = sadd.s32 %s22, %s23
        %s144 = smul.u32 2, %s143
        %p145 = scmp.lt.s32.totalorder %s144, 3
        %s146 = scalar_select %p145, %s144, 3
        %s147 = smul.addr %s146, 2
        %s148 = smul.addr %s147, 4
        %s149 = scalar_lea.vmem %s2, %s148
        %s150 = sadd.s32 %s22, %s23
        %s151 = smul.u32 2, %s150
      $region24: #{lovasz_hinge_loss.1} parent=15 // pred_fallthru
        _
    $region16: #{lovasz_hinge_loss.1} parent=5 // pred_fallthru
      _
    %p152 = scmp.le.s32.totalorder 1, %s15
    %p153 = scmp.lt.s32.totalorder %s15, 3
    %p154 = pnand %p152, %p153
    %p155 = pneg %p154
    // Predicated region
    $region25: #{lovasz_hinge_loss.1} parent=5 // pred_check
      _
    $region26: #{lovasz_hinge_loss.1} parent=5 // pred_check_branch
      %157 = sbr.rel (%p154) target = $region28
    $region27: #{lovasz_hinge_loss.1} parent=5 // pred_region
      %s158 = ssub.s32 %s15, 1
      %s159 = sadd.s32 %s24, %s25
      %s160 = smul.u32 2, %s159
      %p161 = scmp.lt.s32.totalorder %s160, 3
      %s162 = scalar_select %p161, %s160, 3
      %s163 = smul.addr %s162, 2
      %s164 = smul.addr %s163, 8
      %s165 = scalar_lea.vmem %s1, %s164
      %p166 = pneg %p55
      %p167 = pneg %p52
      %s168 = sadd.s32 %s24, %s25
      %s169 = smul.u32 2, %s168
      %p170 = scmp.lt.s32.totalorder %s169, 3
      %s171 = scalar_select %p170, %s169, 3
      %s172 = smul.addr %s171, 2
      %s173 = smul.addr %s172, 4
      %s174 = scalar_lea.vmem %s2, %s173
      %p175 = pneg %p83
      %p176 = pneg %p80
      %p177 = pneg %p109
      %p178 = pneg %p106
      %p179 = scmp.lt.s32.totalorder %s24, 1
      %s180 = scalar_select %p179, %s24, 1
      %s181 = scalar_lea.vmem %s3, %s180
      %s182 = sadd.s32 %s24, %s25
      %s183 = smul.u32 2, %s182
      %p184 = scmp.lt.s32.totalorder %s183, 3
      %s185 = scalar_select %p184, %s183, 3
      %s186 = smul.addr %s185, 2
      %s187 = smul.addr %s186, 8
      %s188 = scalar_lea.vmem %s1, %s187
      %s189 = sadd.s32 %s24, %s25
      %s190 = smul.u32 2, %s189
      %s191 = sadd.s32 %s24, %s25
      %s192 = smul.u32 2, %s191
      %p193 = scmp.lt.s32.totalorder %s192, 3
      %s194 = scalar_select %p193, %s192, 3
      %s195 = smul.addr %s194, 2
      %s196 = smul.addr %s195, 4
      %s197 = scalar_lea.vmem %s2, %s196
      %s198 = sadd.s32 %s24, %s25
      %s199 = smul.u32 2, %s198
      %p200 = scmp.lt.s32.totalorder %s24, 1
      %s201 = scalar_select %p200, %s24, 1
      %s202 = scalar_lea.vmem %s3, %s201
      %p204 = scmp.eq.s32.totalorder %s25, 0
      // Predicated region
      $region29: #{lovasz_hinge_loss.1} parent=27 // pred_check
        %p205 = pneg %p204
      $region30: #{lovasz_hinge_loss.1} parent=27 // pred_check_branch
        %207 = sbr.rel (%p205) target = $region32
      $region31: #{lovasz_hinge_loss.1} parent=27 // pred_region
        %v208 = vlaneseq
        %v209 = vshrl.u32 %v208, 7
        %v210 = vadd.s32 %v209, 8
        %v211 = vadd.s32 %v209, 16
        %v212 = vadd.s32 %v209, 24
        %v213 = vadd.s32 %v209, 32
        %v214 = vadd.s32 %v209, 40
        %v215 = vadd.s32 %v209, 48
        %v216 = vadd.s32 %v209, 56
        %v217 = vadd.s32 %v209, 64
        %v218 = vadd.s32 %v209, 72
        %v219 = vadd.s32 %v209, 80
        %v220 = vadd.s32 %v209, 88
        %v221 = vadd.s32 %v209, 96
        %v222 = vadd.s32 %v209, 104
        %v223 = vadd.s32 %v209, 112
        %v224 = vadd.s32 %v209, 120
        %v225 = vadd.s32 %v209, 128
        %v226 = vadd.s32 %v209, 136
        %v227 = vadd.s32 %v209, 144
        %v228 = vadd.s32 %v209, 152
        %v229 = vadd.s32 %v209, 160
        %v230 = vadd.s32 %v209, 168
        %v231 = vadd.s32 %v209, 176
        %v232 = vadd.s32 %v209, 184
        %v233 = vadd.s32 %v209, 192
        %v234 = vadd.s32 %v209, 200
        %v235 = vadd.s32 %v209, 208
        %v236 = vadd.s32 %v209, 216
        %v237 = vadd.s32 %v209, 224
        %v238 = vadd.s32 %v209, 232
        %v239 = vadd.s32 %v209, 240
        %v240 = vadd.s32 %v209, 248
        %v241 = vlaneseq
        %v242 = vand.u32 %v241, 127
        %v243 = vadd.s32 %v242, 128
        %vm244 = vcmp.le.s32.totalorder %v209, %v242
        %vm245 = vcmp.le.s32.totalorder %v209, %v243
        %vm246 = vcmp.le.s32.totalorder %v210, %v242
        %vm247 = vcmp.le.s32.totalorder %v210, %v243
        %vm248 = vcmp.le.s32.totalorder %v211, %v242
        %vm249 = vcmp.le.s32.totalorder %v211, %v243
        %vm250 = vcmp.le.s32.totalorder %v212, %v242
        %vm251 = vcmp.le.s32.totalorder %v212, %v243
        %vm252 = vcmp.le.s32.totalorder %v213, %v242
        %vm253 = vcmp.le.s32.totalorder %v213, %v243
        %vm254 = vcmp.le.s32.totalorder %v214, %v242
        %vm255 = vcmp.le.s32.totalorder %v214, %v243
        %vm256 = vcmp.le.s32.totalorder %v215, %v242
        %vm257 = vcmp.le.s32.totalorder %v215, %v243
        %vm258 = vcmp.le.s32.totalorder %v216, %v242
        %vm259 = vcmp.le.s32.totalorder %v216, %v243
        %vm260 = vcmp.le.s32.totalorder %v217, %v242
        %vm261 = vcmp.le.s32.totalorder %v217, %v243
        %vm262 = vcmp.le.s32.totalorder %v218, %v242
        %vm263 = vcmp.le.s32.totalorder %v218, %v243
        %vm264 = vcmp.le.s32.totalorder %v219, %v242
        %vm265 = vcmp.le.s32.totalorder %v219, %v243
        %vm266 = vcmp.le.s32.totalorder %v220, %v242
        %vm267 = vcmp.le.s32.totalorder %v220, %v243
        %vm268 = vcmp.le.s32.totalorder %v221, %v242
        %vm269 = vcmp.le.s32.totalorder %v221, %v243
        %vm270 = vcmp.le.s32.totalorder %v222, %v242
        %vm271 = vcmp.le.s32.totalorder %v222, %v243
        %vm272 = vcmp.le.s32.totalorder %v223, %v242
        %vm273 = vcmp.le.s32.totalorder %v223, %v243
        %vm274 = vcmp.le.s32.totalorder %v224, %v242
        %vm275 = vcmp.le.s32.totalorder %v224, %v243
        %vm276 = vcmp.le.s32.totalorder %v225, %v242
        %vm277 = vcmp.le.s32.totalorder %v225, %v243
        %vm278 = vcmp.le.s32.totalorder %v226, %v242
        %vm279 = vcmp.le.s32.totalorder %v226, %v243
        %vm280 = vcmp.le.s32.totalorder %v227, %v242
        %vm281 = vcmp.le.s32.totalorder %v227, %v243
        %vm282 = vcmp.le.s32.totalorder %v228, %v242
        %vm283 = vcmp.le.s32.totalorder %v228, %v243
        %vm284 = vcmp.le.s32.totalorder %v229, %v242
        %vm285 = vcmp.le.s32.totalorder %v229, %v243
        %vm286 = vcmp.le.s32.totalorder %v230, %v242
        %vm287 = vcmp.le.s32.totalorder %v230, %v243
        %vm288 = vcmp.le.s32.totalorder %v231, %v242
        %vm289 = vcmp.le.s32.totalorder %v231, %v243
        %vm290 = vcmp.le.s32.totalorder %v232, %v242
        %vm291 = vcmp.le.s32.totalorder %v232, %v243
        %vm292 = vcmp.le.s32.totalorder %v233, %v242
        %vm293 = vcmp.le.s32.totalorder %v233, %v243
        %vm294 = vcmp.le.s32.totalorder %v234, %v242
        %vm295 = vcmp.le.s32.totalorder %v234, %v243
        %vm296 = vcmp.le.s32.totalorder %v235, %v242
        %vm297 = vcmp.le.s32.totalorder %v235, %v243
        %vm298 = vcmp.le.s32.totalorder %v236, %v242
        %vm299 = vcmp.le.s32.totalorder %v236, %v243
        %vm300 = vcmp.le.s32.totalorder %v237, %v242
        %vm301 = vcmp.le.s32.totalorder %v237, %v243
        %vm302 = vcmp.le.s32.totalorder %v238, %v242
        %vm303 = vcmp.le.s32.totalorder %v238, %v243
        %vm304 = vcmp.le.s32.totalorder %v239, %v242
        %vm305 = vcmp.le.s32.totalorder %v239, %v243
        %vm306 = vcmp.le.s32.totalorder %v240, %v242
        %vm307 = vcmp.le.s32.totalorder %v240, %v243
        %v308 = vsel %vm244, 1.0, 0.0
        %v309 = vsel %vm245, 1.0, 0.0
        %v310 = vsel %vm246, 1.0, 0.0
        %v311 = vsel %vm247, 1.0, 0.0
        %v312 = vsel %vm248, 1.0, 0.0
        %v313 = vsel %vm249, 1.0, 0.0
        %v314 = vsel %vm250, 1.0, 0.0
        %v315 = vsel %vm251, 1.0, 0.0
        %v316 = vsel %vm252, 1.0, 0.0
        %v317 = vsel %vm253, 1.0, 0.0
        %v318 = vsel %vm254, 1.0, 0.0
        %v319 = vsel %vm255, 1.0, 0.0
        %v320 = vsel %vm256, 1.0, 0.0
        %v321 = vsel %vm257, 1.0, 0.0
        %v322 = vsel %vm258, 1.0, 0.0
        %v323 = vsel %vm259, 1.0, 0.0
        %v324 = vsel %vm260, 1.0, 0.0
        %v325 = vsel %vm261, 1.0, 0.0
        %v326 = vsel %vm262, 1.0, 0.0
        %v327 = vsel %vm263, 1.0, 0.0
        %v328 = vsel %vm264, 1.0, 0.0
        %v329 = vsel %vm265, 1.0, 0.0
        %v330 = vsel %vm266, 1.0, 0.0
        %v331 = vsel %vm267, 1.0, 0.0
        %v332 = vsel %vm268, 1.0, 0.0
        %v333 = vsel %vm269, 1.0, 0.0
        %v334 = vsel %vm270, 1.0, 0.0
        %v335 = vsel %vm271, 1.0, 0.0
        %v336 = vsel %vm272, 1.0, 0.0
        %v337 = vsel %vm273, 1.0, 0.0
        %v338 = vsel %vm274, 1.0, 0.0
        %v339 = vsel %vm275, 1.0, 0.0
        %v340 = vsel %vm276, 1.0, 0.0
        %v341 = vsel %vm277, 1.0, 0.0
        %v342 = vsel %vm278, 1.0, 0.0
        %v343 = vsel %vm279, 1.0, 0.0
        %v344 = vsel %vm280, 1.0, 0.0
        %v345 = vsel %vm281, 1.0, 0.0
        %v346 = vsel %vm282, 1.0, 0.0
        %v347 = vsel %vm283, 1.0, 0.0
        %v348 = vsel %vm284, 1.0, 0.0
        %v349 = vsel %vm285, 1.0, 0.0
        %v350 = vsel %vm286, 1.0, 0.0
        %v351 = vsel %vm287, 1.0, 0.0
        %v352 = vsel %vm288, 1.0, 0.0
        %v353 = vsel %vm289, 1.0, 0.0
        %v354 = vsel %vm290, 1.0, 0.0
        %v355 = vsel %vm291, 1.0, 0.0
        %v356 = vsel %vm292, 1.0, 0.0
        %v357 = vsel %vm293, 1.0, 0.0
        %v358 = vsel %vm294, 1.0, 0.0
        %v359 = vsel %vm295, 1.0, 0.0
        %v360 = vsel %vm296, 1.0, 0.0
        %v361 = vsel %vm297, 1.0, 0.0
        %v362 = vsel %vm298, 1.0, 0.0
        %v363 = vsel %vm299, 1.0, 0.0
        %v364 = vsel %vm300, 1.0, 0.0
        %v365 = vsel %vm301, 1.0, 0.0
        %v366 = vsel %vm302, 1.0, 0.0
        %v367 = vsel %vm303, 1.0, 0.0
        %v368 = vsel %vm304, 1.0, 0.0
        %v369 = vsel %vm305, 1.0, 0.0
        %v370 = vsel %vm306, 1.0, 0.0
        %v371 = vsel %vm307, 1.0, 0.0
        %v372 = vpack.c.bf16 %v310, %v308
        %v373 = vpack.c.bf16 %v311, %v309
        %v374 = vpack.c.bf16 %v314, %v312
        %v375 = vpack.c.bf16 %v315, %v313
        %v376 = vpack.c.bf16 %v318, %v316
        %v377 = vpack.c.bf16 %v319, %v317
        %v378 = vpack.c.bf16 %v322, %v320
        %v379 = vpack.c.bf16 %v323, %v321
        %v380 = vpack.c.bf16 %v326, %v324
        %v381 = vpack.c.bf16 %v327, %v325
        %v382 = vpack.c.bf16 %v330, %v328
        %v383 = vpack.c.bf16 %v331, %v329
        %v384 = vpack.c.bf16 %v334, %v332
        %v385 = vpack.c.bf16 %v335, %v333
        %v386 = vpack.c.bf16 %v338, %v336
        %v387 = vpack.c.bf16 %v339, %v337
        %v388 = vpack.c.bf16 %v342, %v340
        %v389 = vpack.c.bf16 %v343, %v341
        %v390 = vpack.c.bf16 %v346, %v344
        %v391 = vpack.c.bf16 %v347, %v345
        %v392 = vpack.c.bf16 %v350, %v348
        %v393 = vpack.c.bf16 %v351, %v349
        %v394 = vpack.c.bf16 %v354, %v352
        %v395 = vpack.c.bf16 %v355, %v353
        %v396 = vpack.c.bf16 %v358, %v356
        %v397 = vpack.c.bf16 %v359, %v357
        %v398 = vpack.c.bf16 %v362, %v360
        %v399 = vpack.c.bf16 %v363, %v361
        %v400 = vpack.c.bf16 %v366, %v364
        %v401 = vpack.c.bf16 %v367, %v365
        %v402 = vpack.c.bf16 %v370, %v368
        %v403 = vpack.c.bf16 %v371, %v369
        %404 = vst [vmem:[#allocation2] sm:$0xff] %v372
        %405 = vst [vmem:[#allocation2 + $0x8] sm:$0xff] %v373
        %406 = vst [vmem:[#allocation2 + $0x10] sm:$0xff] %v374
        %407 = vst [vmem:[#allocation2 + $0x18] sm:$0xff] %v375
        %408 = vst [vmem:[#allocation2 + $0x20] sm:$0xff] %v376
        %409 = vst [vmem:[#allocation2 + $0x28] sm:$0xff] %v377
        %410 = vst [vmem:[#allocation2 + $0x30] sm:$0xff] %v378
        %411 = vst [vmem:[#allocation2 + $0x38] sm:$0xff] %v379
        %412 = vst [vmem:[#allocation2 + $0x40] sm:$0xff] %v380
        %413 = vst [vmem:[#allocation2 + $0x48] sm:$0xff] %v381
        %414 = vst [vmem:[#allocation2 + $0x50] sm:$0xff] %v382
        %415 = vst [vmem:[#allocation2 + $0x58] sm:$0xff] %v383
        %416 = vst [vmem:[#allocation2 + $0x60] sm:$0xff] %v384
        %417 = vst [vmem:[#allocation2 + $0x68] sm:$0xff] %v385
        %418 = vst [vmem:[#allocation2 + $0x70] sm:$0xff] %v386
        %419 = vst [vmem:[#allocation2 + $0x78] sm:$0xff] %v387
        %420 = vst [vmem:[#allocation2 + $0x80] sm:$0xff] %v388
        %421 = vst [vmem:[#allocation2 + $0x88] sm:$0xff] %v389
        %422 = vst [vmem:[#allocation2 + $0x90] sm:$0xff] %v390
        %423 = vst [vmem:[#allocation2 + $0x98] sm:$0xff] %v391
        %424 = vst [vmem:[#allocation2 + $0xa0] sm:$0xff] %v392
        %425 = vst [vmem:[#allocation2 + $0xa8] sm:$0xff] %v393
        %426 = vst [vmem:[#allocation2 + $0xb0] sm:$0xff] %v394
        %427 = vst [vmem:[#allocation2 + $0xb8] sm:$0xff] %v395
        %428 = vst [vmem:[#allocation2 + $0xc0] sm:$0xff] %v396
        %429 = vst [vmem:[#allocation2 + $0xc8] sm:$0xff] %v397
        %430 = vst [vmem:[#allocation2 + $0xd0] sm:$0xff] %v398
        %431 = vst [vmem:[#allocation2 + $0xd8] sm:$0xff] %v399
        %432 = vst [vmem:[#allocation2 + $0xe0] sm:$0xff] %v400
        %433 = vst [vmem:[#allocation2 + $0xe8] sm:$0xff] %v401
        %434 = vst [vmem:[#allocation2 + $0xf0] sm:$0xff] %v402
        %435 = vst [vmem:[#allocation2 + $0xf8] sm:$0xff] %v403
        %vm436 = vcmp.lt.s32.totalorder %v242, %v209
        %vm437 = vcmp.lt.s32.totalorder %v242, %v210
        %v438 = vsel %vm436, 1.0, 0.0
        %v439 = vsel %vm437, 1.0, 0.0
        %v440 = vpack.c.bf16 %v439, %v438
        %vm441 = vcmask 130048
        %442 = vst.msk [vmem:[#allocation3] sm:$0xff] %vm441, %v440
        %v443 = vmul.u32 %v209, 256
        %v444 = vmul.u32 %v210, 256
        %v445 = vadd.s32 %v443, %v242
        %v446 = vadd.s32 %v443, %v243
        %v447 = vadd.s32 %v444, %v242
        %v448 = vadd.s32 %v444, %v243
        %v449 = vadd.s32 %v445, 1
        %v450 = vadd.s32 %v446, 1
        %v451 = vadd.s32 %v447, 1
        %v452 = vadd.s32 %v448, 1
        %v453 = vcvt.s32.f32 %v449
        %v454 = vcvt.s32.f32 %v450
        %v455 = vcvt.s32.f32 %v451
        %v456 = vcvt.s32.f32 %v452
        %457 = vst [vmem:[#allocation4] sm:$0xff] %v453
        %458 = vst [vmem:[#allocation4 + $0x8] sm:$0xff] %v454
        %459 = vst [vmem:[#allocation4 + $0x10] sm:$0xff] %v455
        %460 = vst [vmem:[#allocation4 + $0x18] sm:$0xff] %v456
        %vm461 = vcmask 0
        %462 = vst.msk [vmem:[#allocation5] sm:$0x1] %vm461, 0.0
        %463 = vst [vmem:[%s202] sm:$0x1] 0.0
      $region32: #{lovasz_hinge_loss.1} parent=27 // pred_fallthru
        _
      %s464 = sld [smem:[#allocation7 + %s24]]
      %v465 = vld [vmem:[#allocation5] sm:$0x1]
      %v466 = vld [vmem:[#allocation2] sm:$0xff]
      %v467 = vld [vmem:[#allocation2 + $0x8] sm:$0xff]
      %v468 = vld [vmem:[#allocation2 + $0x10] sm:$0xff]
      %v469 = vld [vmem:[#allocation2 + $0x18] sm:$0xff]
      %v470 = vld [vmem:[#allocation2 + $0x20] sm:$0xff]
      %v471 = vld [vmem:[#allocation2 + $0x28] sm:$0xff]
      %v472 = vld [vmem:[#allocation2 + $0x30] sm:$0xff]
      %v473 = vld [vmem:[#allocation2 + $0x38] sm:$0xff]
      %v474 = vld [vmem:[#allocation2 + $0x40] sm:$0xff]
      %v475 = vld [vmem:[#allocation2 + $0x48] sm:$0xff]
      %v476 = vld [vmem:[#allocation2 + $0x50] sm:$0xff]
      %v477 = vld [vmem:[#allocation2 + $0x58] sm:$0xff]
      %v478 = vld [vmem:[#allocation2 + $0x60] sm:$0xff]
      %v479 = vld [vmem:[#allocation2 + $0x68] sm:$0xff]
      %v480 = vld [vmem:[#allocation2 + $0x70] sm:$0xff]
      %v481 = vld [vmem:[#allocation2 + $0x78] sm:$0xff]
      %v482 = vld [vmem:[#allocation2 + $0x80] sm:$0xff]
      %v483 = vld [vmem:[#allocation2 + $0x88] sm:$0xff]
      %v484 = vld [vmem:[#allocation2 + $0x90] sm:$0xff]
      %v485 = vld [vmem:[#allocation2 + $0x98] sm:$0xff]
      %v486 = vld [vmem:[#allocation2 + $0xa0] sm:$0xff]
      %v487 = vld [vmem:[#allocation2 + $0xa8] sm:$0xff]
      %v488 = vld [vmem:[#allocation2 + $0xb0] sm:$0xff]
      %v489 = vld [vmem:[#allocation2 + $0xb8] sm:$0xff]
      %v490 = vld [vmem:[#allocation2 + $0xc0] sm:$0xff]
      %v491 = vld [vmem:[#allocation2 + $0xc8] sm:$0xff]
      %v492 = vld [vmem:[#allocation2 + $0xd0] sm:$0xff]
      %v493 = vld [vmem:[#allocation2 + $0xd8] sm:$0xff]
      %v494 = vld [vmem:[#allocation2 + $0xe0] sm:$0xff]
      %v495 = vld [vmem:[#allocation2 + $0xe8] sm:$0xff]
      %v496 = vld [vmem:[#allocation2 + $0xf0] sm:$0xff]
      %v497 = vld [vmem:[#allocation2 + $0xf8] sm:$0xff]
      %v498 = vld [vmem:[#allocation3] sm:$0xff]
      %v499 = vld [vmem:[#allocation4] sm:$0xff]
      %v500 = vld [vmem:[#allocation4 + $0x8] sm:$0xff]
      %v501 = vld [vmem:[#allocation4 + $0x10] sm:$0xff]
      %v502 = vld [vmem:[#allocation4 + $0x18] sm:$0xff]
      %v503 = vld [vmem:[%s197] sm:$0xff]
      %v504 = vld [vmem:[%s197 + $0x8] sm:$0xff]
      %v505 = vld [vmem:[%s188] sm:$0xff]
      %v506 = vld [vmem:[%s188 + $0x8] sm:$0xff]
      %v507 = vld [vmem:[%s188 + $0x10] sm:$0xff]
      %v508 = vld [vmem:[%s188 + $0x18] sm:$0xff]
      %v509 = vunpack.c.l.bf16 %v503
      %v510 = vunpack.c.h.bf16 %v503
      %v511 = vunpack.c.l.bf16 %v504
      %v512 = vunpack.c.h.bf16 %v504
      %v515 = vunpack.c.l.b16 %v503
      %v516 = vunpack.c.h.b16 %v503
      %v517 = vunpack.c.l.b16 %v504
      %v518 = vunpack.c.h.b16 %v504
      %v519 = vpack.c.b16 %v517, %v515
      %v520 = vpack.c.b16 %v518, %v516
      %523 = vmatprep.subr.bf16.mxu0 %v467
      %524 = vmatpush1.bf16.msra.mxu0 %v466
      %525 = vmatprep.subr.bf16.mxu0 %v469
      %526 = vmatpush1.bf16.msra.mxu0 %v468
      %527 = vmatprep.subr.bf16.mxu0 %v471
      %528 = vmatpush1.bf16.msra.mxu0 %v470
      %529 = vmatprep.subr.bf16.mxu0 %v473
      %530 = vmatpush1.bf16.msra.mxu0 %v472
      %531 = vmatprep.subr.bf16.mxu0 %v475
      %532 = vmatpush1.bf16.msra.mxu0 %v474
      %533 = vmatprep.subr.bf16.mxu0 %v477
      %534 = vmatpush1.bf16.msra.mxu0 %v476
      %535 = vmatprep.subr.bf16.mxu0 %v479
      %536 = vmatpush1.bf16.msra.mxu0 %v478
      %537 = vmatprep.subr.bf16.mxu0 %v481
      %538 = vmatpush1.bf16.msra.mxu0 %v480
      %539 = vmatprep.subr.bf16.mxu0 %v483
      %540 = vmatpush1.bf16.msra.mxu0 %v482
      %541 = vmatprep.subr.bf16.mxu0 %v485
      %542 = vmatpush1.bf16.msra.mxu0 %v484
      %543 = vmatprep.subr.bf16.mxu0 %v487
      %544 = vmatpush1.bf16.msra.mxu0 %v486
      %545 = vmatprep.subr.bf16.mxu0 %v489
      %546 = vmatpush1.bf16.msra.mxu0 %v488
      %547 = vmatprep.subr.bf16.mxu0 %v491
      %548 = vmatpush1.bf16.msra.mxu0 %v490
      %549 = vmatprep.subr.bf16.mxu0 %v493
      %550 = vmatpush1.bf16.msra.mxu0 %v492
      %551 = vmatprep.subr.bf16.mxu0 %v495
      %552 = vmatpush1.bf16.msra.mxu0 %v494
      %553 = vmatprep.subr.bf16.mxu0 %v497
      %554 = vmatpush1.bf16.msra.mxu0 %v496
      %555 = vmatprep.mubr.bf16.mxu0 %v520
      %556 = vmatmul.mubr.bf16.gmra.mrb[0].mxu0 %v519
      %v557 = vpop.f32.mrb[0].mxu0
      %v558 = vadd.f32 0.0, %v557
      %v559 = vpop.f32.mrb[0].mxu0
      %v560 = vadd.f32 0.0, %v559
      %v561 = vpop.f32.mrb[0].mxu0
      %v562 = vadd.f32 0.0, %v561
      %v563 = vpop.f32.mrb[0].mxu0
      %v564 = vadd.f32 0.0, %v563
      %565 = vdwg.mxu0
      %v566 = vpack.c.bf16 %v564, %v560
      %v568 = vlaneseq
      %v569 = vshrl.u32 %v568, 7
      %v570 = vsub.s32 0, %v569
      %v571 = vrot.slane %v465, %v570
      %574 = vrot.lane.b32.xlu0 %v566, 1
      %v575 = vpop.permute.xlu0 %574
      %vm577 = vcmask 130048
      %v579 = vsel %vm577, %v498, 0
      %581 = vmatprep.subr.bf16.mxu0 0
      %582 = vmatpush1.bf16.msra.mxu0 %v575
      %583 = vmatprep.subr.bf16.mxu0 0
      %584 = vmatpush1.bf16.msra.mxu0 0
      %585 = vmatprep.subr.bf16.mxu0 0
      %586 = vmatpush1.bf16.msra.mxu0 0
      %587 = vmatprep.subr.bf16.mxu0 0
      %588 = vmatpush1.bf16.msra.mxu0 0
      %589 = vmatprep.subr.bf16.mxu0 0
      %590 = vmatpush1.bf16.msra.mxu0 0
      %591 = vmatprep.subr.bf16.mxu0 0
      %592 = vmatpush1.bf16.msra.mxu0 0
      %593 = vmatprep.subr.bf16.mxu0 0
      %594 = vmatpush1.bf16.msra.mxu0 0
      %595 = vmatprep.subr.bf16.mxu0 0
      %596 = vmatpush1.bf16.msra.mxu0 0
      %597 = vmatprep.subr.bf16.mxu0 0
      %598 = vmatpush1.bf16.msra.mxu0 0
      %599 = vmatprep.subr.bf16.mxu0 0
      %600 = vmatpush1.bf16.msra.mxu0 0
      %601 = vmatprep.subr.bf16.mxu0 0
      %602 = vmatpush1.bf16.msra.mxu0 0
      %603 = vmatprep.subr.bf16.mxu0 0
      %604 = vmatpush1.bf16.msra.mxu0 0
      %605 = vmatprep.subr.bf16.mxu0 0
      %606 = vmatpush1.bf16.msra.mxu0 0
      %607 = vmatprep.subr.bf16.mxu0 0
      %608 = vmatpush1.bf16.msra.mxu0 0
      %609 = vmatprep.subr.bf16.mxu0 0
      %610 = vmatpush1.bf16.msra.mxu0 0
      %611 = vmatprep.subr.bf16.mxu0 0
      %612 = vmatpush1.bf16.msra.mxu0 0
      %613 = vmatprep.mubr.bf16.mxu0 0
      %614 = vmatmul.mubr.bf16.gmra.mrb[0].mxu0 %v579
      %v615 = vpop.f32.mrb[0].mxu0
      %v616 = vadd.f32 %v571, %v615
      %v617 = vpop.f32.mrb[0].mxu0
      %v618 = vpop.f32.mrb[0].mxu0
      %v619 = vadd.f32 %v571, %v618
      %v620 = vpop.f32.mrb[0].mxu0
      %621 = vdwg.mxu0
      %623 = vset.pattern.permute.xlu0 0
      %624 = vperm.xlu0 %623, %v616
      %v625 = vpop.permute.xlu0 %624
      %628 = vset.pattern.permute.xlu0 0
      %629 = vperm.xlu0 %628, %v619
      %v630 = vpop.permute.xlu0 %629
      %v632 = vadd.f32 %v558, %v625
      %v633 = vadd.f32 %v560, %v625
      %v634 = vadd.f32 %v562, %v630
      %v635 = vadd.f32 %v564, %v630
      %s636 = smul.u32 %s25, 4096
      %s637 = scvt.s32.f32 %s636
      %v638 = vstv %s637
      %v639 = vadd.f32 %v499, %v638
      %v640 = vadd.f32 %v500, %v638
      %v641 = vadd.f32 %v501, %v638
      %v642 = vadd.f32 %v502, %v638
      %v643 = vstv %s464
      %v644 = vsub.f32 %v643, %v632
      %v645 = vsub.f32 %v643, %v633
      %v646 = vsub.f32 %v643, %v634
      %v647 = vsub.f32 %v643, %v635
      %v648 = vadd.f32 %v644, %v639
      %v649 = vadd.f32 %v645, %v640
      %v650 = vadd.f32 %v646, %v641
      %v651 = vadd.f32 %v647, %v642
      %v652 = vrcp.pop %v648
      %v653 = vrcp.pop %v649
      %v654 = vrcp.pop %v650
      %v655 = vrcp.pop %v651
      %v656 = vmul.f32 %v644, %v652
      %v657 = vmul.f32 %v645, %v653
      %v658 = vmul.f32 %v646, %v654
      %v659 = vmul.f32 %v647, %v655
      %v660 = vadd.f32 %v644, %v509
      %v661 = vadd.f32 %v645, %v510
      %v662 = vadd.f32 %v646, %v511
      %v663 = vadd.f32 %v647, %v512
      %v664 = vsub.f32 %v509, 1.0
      %v665 = vsub.f32 %v510, 1.0
      %v666 = vsub.f32 %v511, 1.0
      %v667 = vsub.f32 %v512, 1.0
      %v668 = vadd.f32 %v648, %v664
      %v669 = vadd.f32 %v649, %v665
      %v670 = vadd.f32 %v650, %v666
      %v671 = vadd.f32 %v651, %v667
      %v672 = vrcp.pop %v668
      %v673 = vrcp.pop %v669
      %v674 = vrcp.pop %v670
      %v675 = vrcp.pop %v671
      %v676 = vmul.f32 %v660, %v672
      %v677 = vmul.f32 %v661, %v673
      %v678 = vmul.f32 %v662, %v674
      %v679 = vmul.f32 %v663, %v675
      %vm680 = vcmp.gt.f32.partialorder %v668, 0.0
      %vm681 = vcmp.gt.f32.partialorder %v669, 0.0
      %vm682 = vcmp.gt.f32.partialorder %v670, 0.0
      %vm683 = vcmp.gt.f32.partialorder %v671, 0.0
      %v684 = vsel %vm680, %v676, 1.0
      %v685 = vsel %vm681, %v677, 1.0
      %v686 = vsel %vm682, %v678, 1.0
      %v687 = vsel %vm683, %v679, 1.0
      %v688 = vsub.f32 %v684, %v656
      %v689 = vsub.f32 %v685, %v657
      %v690 = vsub.f32 %v686, %v658
      %v691 = vsub.f32 %v687, %v659
      %v692 = vmax.f32 %v505, 0.0
      %v693 = vmax.f32 %v506, 0.0
      %v694 = vmax.f32 %v507, 0.0
      %v695 = vmax.f32 %v508, 0.0
      %v696 = vmul.f32 %v692, %v688
      %v697 = vmul.f32 %v693, %v689
      %v698 = vmul.f32 %v694, %v690
      %v699 = vmul.f32 %v695, %v691
      %v700 = vadd.f32 %v696, %v697
      %v701 = vadd.f32 %v700, %v698
      %v702 = vadd.f32 %v701, %v699
      %703 = vadd.xlane.f32.xlu0 %v702
      %v704 = vpop.xlane.xlu0 %703
      %v705 = vrot.slane %v704, 4
      %v706 = vadd.f32 %v704, %v705
      %v707 = vrot.slane %v706, 2
      %v708 = vadd.f32 %v706, %v707
      %v709 = vrot.slane %v708, 1
      %v710 = vadd.f32 %v708, %v709
      %s711 = vtos %v710
      %s712 = sadd.f32 %s711, 0.0
      %v713 = vadd.f32 %v509, %v510
      %v714 = vadd.f32 %v713, %v511
      %v715 = vadd.f32 %v714, %v512
      %716 = vadd.xlane.f32.xlu0 %v715
      %v717 = vpop.xlane.xlu0 %716
      %v718 = vrot.slane %v717, 4
      %v719 = vadd.f32 %v717, %v718
      %v720 = vrot.slane %v719, 2
      %v721 = vadd.f32 %v719, %v720
      %v722 = vrot.slane %v721, 1
      %v723 = vadd.f32 %v721, %v722
      %s724 = vtos %v723
      %v725 = vstv %s724
      %v726 = vadd.f32 %v465, %v725
      %v727 = vld [vmem:[%s202] sm:$0x1]
      %v728 = vstv %s712
      %v729 = vadd.f32 %v727, %v728
      %730 = vst [vmem:[%s202] sm:$0x1] %v729
      %vm731 = vcmask 0
      %732 = vst.msk [vmem:[#allocation5] sm:$0x1] %vm731, %v726
      %p733 = scmp.lt.s32.totalorder %s24, 1
      %s734 = scalar_select %p733, %s24, 1
      %s735 = scalar_lea.vmem %s3, %s734
      // Predicated region
      $region33: #{lovasz_hinge_loss.1} parent=27 // pred_check
        %p736 = pneg %p106
      $region34: #{lovasz_hinge_loss.1} parent=27 // pred_check_branch
        %738 = sbr.rel (%p736) target = $region36
      $region35: #{lovasz_hinge_loss.1} parent=27 // pred_region
        _
      $region36: #{lovasz_hinge_loss.1} parent=27 // pred_fallthru
        _
    $region28: #{lovasz_hinge_loss.1} parent=5 // pred_fallthru
      _
    %p739 = scmp.le.s32.totalorder 2, %s15
    // Predicated region
    $region37: #{lovasz_hinge_loss.1} parent=5 // pred_check
      %p740 = pneg %p739
    $region38: #{lovasz_hinge_loss.1} parent=5 // pred_check_branch
      %742 = sbr.rel (%p740) target = $region40
    $region39: #{lovasz_hinge_loss.1} parent=5 // pred_region
      %s743 = ssub.s32 %s15, 2
      // Predicated region
      $region41: #{lovasz_hinge_loss.1} parent=39 // pred_check
        %p744 = pneg %p112
      $region42: #{lovasz_hinge_loss.1} parent=39 // pred_check_branch
        %746 = sbr.rel (%p744) target = $region44
      $region43: #{lovasz_hinge_loss.1} parent=39 // pred_region
        %p747 = scmp.lt.s32.totalorder %s26, 1
        %s748 = scalar_select %p747, %s26, 1
        %s749 = scalar_lea.vmem %s3, %s748
      $region44: #{lovasz_hinge_loss.1} parent=39 // pred_fallthru
        _
    $region40: #{lovasz_hinge_loss.1} parent=5 // pred_fallthru
      _
  $region6: #{lovasz_hinge_loss.1} parent=0 // loop_footer
    %s19 = sadd.s32 1, %s15
  $region7: #{lovasz_hinge_loss.1} parent=0 // loop_footer_branch
    %14 = sbr.rel target = $region3
  $region8: #{lovasz_hinge_loss.1} parent=0 // loop_exit
    _

</llo_original>
